<compile_context>
chip_gen: v7x
topology: tpu7x:2x2x1
jax: 0.10.0
libtpu: 0.0.40
codegen_flags: <defaults>
</compile_context>

<pallas_src>
import functools
import math

import jax
import jax.numpy as jnp
from jax.experimental import pallas as pl
from jax.experimental.pallas import tpu as pltpu

_LANE = 128
_SUBLANE = 8
_TILE = _SUBLANE * _LANE          # one f32 vreg = 1024 elements
_MAX_BLOCK_ROWS = 2048            # 2048 x 128 f32 = 1 MiB per input per buffer


def _round_up(x, m):
    return (x + m - 1) // m * m


def _int_pow(base, gamma):
    """base**gamma without EUP transcendentals when gamma is a small integer."""
    g = float(gamma)
    if g.is_integer() and 0 <= int(g) <= 8:
        n = int(g)
        if n == 0:
            return jnp.ones_like(base)
        out = base
        for _ in range(n - 1):
            out = out * base
        return out
    return jnp.power(base, g)          # fallback: exp(gamma * log(base))


def _focal_kernel(x_ref, t_ref, psum_ref, *, alpha, gamma, smooth,
                  ignore_index, count, block_rows, needs_mask):
    c = pl.program_id(0)               # which partial sum     ("parallel")
    j = pl.program_id(1)               # reduction step        ("arbitrary")
    nj = pl.num_programs(1)

    @pl.when(j == 0)
    def _():
        psum_ref[...] = jnp.zeros_like(psum_ref)

    x = x_ref[...].astype(jnp.float32)     # logits   (block_rows, 128)
    t = t_ref[...].astype(jnp.float32)     # targets  (block_rows, 128)

    # One stable log-sigmoid drives every transcendental term.
    ls = jnp.minimum(x, 0.0) - jnp.log1p(jnp.exp(-jnp.abs(x)))   # log(sigmoid(x))
    prob = jnp.clip(jnp.exp(ls), smooth, 1.0 - smooth)           # clipped sigmoid
    log_prob = jnp.clip(ls, math.log(smooth), math.log(1.0 - smooth))
    log_sig_neg = ls - x                                         # log(sigmoid(-x))

    pos_mask = (t == 1.0).astype(jnp.float32)
    neg_mask = (t == 0.0).astype(jnp.float32)
    if ignore_index is not None:
        valid = (t != float(ignore_index)).astype(jnp.float32)
        pos_mask = pos_mask * valid
        neg_mask = neg_mask * valid

    pos_w = pos_mask * _int_pow(1.0 - prob, gamma)
    neg_w = neg_mask * _int_pow(prob, gamma)
    loss = -pos_w * log_prob - alpha * neg_w * log_sig_neg

    if needs_mask:
        # Zero out lane padding, rows past the end of the data, and the fully
        # out-of-range (clamped) blocks of the last partial.
        base = (c * nj + j) * (block_rows * _LANE)
        row = jax.lax.broadcasted_iota(jnp.int32, loss.shape, 0)
        lane = jax.lax.broadcasted_iota(jnp.int32, loss.shape, 1)
        flat_idx = base + row * _LANE + lane
        loss = jnp.where(flat_idx < count, loss, 0.0)

    # Leading-axis reduce = plain VPU vreg adds into the resident accumulator.
    psum_ref[...] += loss.reshape(-1, _SUBLANE, _LANE).sum(axis=0)[None, :, :]


def binary_focal_loss(output, target, *, alpha=3.0, gamma=2.0, smooth=1e-6,
                      ignore_index=None):
    """Equivalent of BinaryFocalLoss(alpha, gamma).forward(output, target)."""
    assert output.shape == target.shape
    count = int(output.size)
    assert 0 < count < 2**31   # in-kernel flat-index mask uses int32

    # Flatten (free); keep native dtypes, cast to f32 inside the kernel.
    x = output.reshape(-1)
    t = target.reshape(-1)

    # Pad only when numel is not a multiple of one (8, 128) vreg tile; padded
    # elements are masked in-kernel so the pad values do not matter.
    padded = _round_up(count, _TILE)
    if padded != count:
        x = jnp.pad(x, (0, padded - count))
        t = jnp.pad(t, (0, padded - count))

    rows = padded // _LANE                       # multiple of 8
    x2 = x.reshape(rows, _LANE)
    t2 = t.reshape(rows, _LANE)

    block_rows = min(_MAX_BLOCK_ROWS, rows)      # multiple of 8, <= rows
    n_blocks = pl.cdiv(rows, block_rows)
    n_partials = 2 if n_blocks >= 2 else 1       # feeds both v7x TensorCores
    bpp = pl.cdiv(n_blocks, n_partials)          # reduction steps per partial
    covered = n_partials * bpp * block_rows * _LANE
    needs_mask = covered != count

    def in_map(c, j):
        idx = c * bpp + j
        if n_partials * bpp != n_blocks:           # static: clamp the (masked)
            idx = jnp.minimum(idx, n_blocks - 1)   # out-of-range block ids
        return (idx, 0)

    kernel = functools.partial(
        _focal_kernel, alpha=float(alpha), gamma=float(gamma),
        smooth=float(smooth), ignore_index=ignore_index, count=count,
        block_rows=block_rows, needs_mask=needs_mask)

    partials = pl.pallas_call(
        kernel,
        out_shape=jax.ShapeDtypeStruct((n_partials, _SUBLANE, _LANE), jnp.float32),
        grid_spec=pltpu.PrefetchScalarGridSpec(
            num_scalar_prefetch=0,
            grid=(n_partials, bpp),
            in_specs=[pl.BlockSpec((block_rows, _LANE), in_map),
                      pl.BlockSpec((block_rows, _LANE), in_map)],
            out_specs=pl.BlockSpec((1, _SUBLANE, _LANE), lambda c, j: (c, 0, 0)),
        ),
        compiler_params=pltpu.CompilerParams(
            dimension_semantics=("parallel", "arbitrary")),
    )(x2, t2)

    # TODO(synk): reduction='none'/'sum' variants not implemented (module
    # default is 'mean').
    return jnp.sum(partials) / jnp.float32(count)


def _reference(output, target, alpha=3.0, gamma=2.0, smooth=1e-6):
    prob = jnp.clip(jax.nn.sigmoid(output), smooth, 1.0 - smooth)
    pos_mask = (target == 1).astype(jnp.float32)
    neg_mask = (target == 0).astype(jnp.float32)
    pos_loss = -pos_mask * jnp.power(1.0 - prob, gamma) * jnp.log(prob)
    neg_loss = -alpha * neg_mask * jnp.power(prob, gamma) * jax.nn.log_sigmoid(-output)
    return jnp.mean(pos_loss + neg_loss)


def _check(shape, k1, k2, rtol=1e-4, atol=1e-6):
    logits = jax.random.normal(k1, shape, dtype=jnp.float32) * 2.0
    target = jax.random.bernoulli(k2, 0.4, shape).astype(jnp.float32)
    got = jax.block_until_ready(binary_focal_loss(logits, target))
    ref = _reference(logits, target)
    assert jnp.allclose(got, ref, rtol=rtol, atol=atol), (shape, got, ref)


if __name__ == "__main__":
    key = jax.random.PRNGKey(0)
    keys = jax.random.split(key, 6)

    # Primary: small NCHW shape consistent with the module.
    _check((2, 4, 16, 16), keys[0], keys[1])

    # Non-aligned numel: exercises the small pad + in-kernel tail mask.
    _check((2, 3, 7, 9), keys[2], keys[3])

    # Larger input: exercises the 2-partial ("parallel") axis, multi-step
    # accumulation, the clamped out-of-range block and boundary masking.
    _check((2, 4, 192, 384), keys[4], keys[5])

    print("KERNEL_OK")
</pallas_src>

<mosaic_0001>
module attributes {stable_mosaic.version = 11 : i64} {
  func.func @_focal_kernel(%arg0: i32, %arg1: i32, %arg2: memref<16x128xf32, #tpu.memory_space<vmem>>, %arg3: memref<16x128xf32, #tpu.memory_space<vmem>>, %arg4: memref<1x8x128xf32, #tpu.memory_space<vmem>>) attributes {dimension_semantics = [#tpu.dimension_semantics<parallel>, #tpu.dimension_semantics<arbitrary>], iteration_bounds = array<i64: 1, 1>, scalar_prefetch = 0 : i64, scratch_operands = 0 : i64, tpu.core_type = #tpu.core_type<tc>, window_params = [{transform_indices = @transform_0, window_bounds = array<i64: 16, 128>}, {transform_indices = @transform_1, window_bounds = array<i64: 16, 128>}, {transform_indices = @transform_2, window_bounds = array<i64: 1, 8, 128>}]} {
    %c0_i32 = arith.constant 0 : i32
    %0 = arith.cmpi eq, %arg1, %c0_i32 : i32
    %1 = arith.extui %0 : i1 to i32
    %c0_i32_0 = arith.constant 0 : i32
    %2 = arith.cmpi ne, %1, %c0_i32_0 : i32
    scf.if %2 {
      %cst_21 = arith.constant 0.000000e+00 : f32
      %50 = vector.broadcast %cst_21 : f32 to vector<1x8x128xf32>
      %c0_22 = arith.constant 0 : index
      %c0_23 = arith.constant 0 : index
      %c0_24 = arith.constant 0 : index
      %51 = vector.load %arg4[%c0_22, %c0_23, %c0_24] : memref<1x8x128xf32, #tpu.memory_space<vmem>>, vector<1x8x128xf32>
      tpu.vector_store %arg4[%c0_22, %c0_23, %c0_24], %50 {strides = array<i32>} : memref<1x8x128xf32, #tpu.memory_space<vmem>>, vector<1x8x128xf32>,
    } else {
    }
    %c0 = arith.constant 0 : index
    %c0_1 = arith.constant 0 : index
    %3 = vector.load %arg2[%c0, %c0_1] : memref<16x128xf32, #tpu.memory_space<vmem>>, vector<16x128xf32>
    %c0_2 = arith.constant 0 : index
    %c0_3 = arith.constant 0 : index
    %4 = vector.load %arg3[%c0_2, %c0_3] : memref<16x128xf32, #tpu.memory_space<vmem>>, vector<16x128xf32>
    %cst = arith.constant 0.000000e+00 : f32
    %5 = vector.broadcast %cst : f32 to vector<16x128xf32>
    %6 = arith.minimumf %3, %5 : vector<16x128xf32>
    %7 = math.absf %3 : vector<16x128xf32>
    %cst_4 = arith.constant 0.000000e+00 : f32
    %8 = vector.broadcast %cst_4 : f32 to vector<16x128xf32>
    %9 = arith.subf %8, %7 : vector<16x128xf32>
    %10 = math.exp %9 : vector<16x128xf32>
    %11 = math.log1p %10 : vector<16x128xf32>
    %12 = arith.subf %6, %11 : vector<16x128xf32>
    %13 = math.exp %12 : vector<16x128xf32>
    %cst_5 = arith.constant 9.99999997E-7 : f32
    %cst_6 = arith.constant 0.999998986 : f32
    %14 = vector.broadcast %cst_5 : f32 to vector<16x128xf32>
    %15 = arith.maximumf %14, %13 : vector<16x128xf32>
    %16 = vector.broadcast %cst_6 : f32 to vector<16x128xf32>
    %17 = arith.minimumf %16, %15 : vector<16x128xf32>
    %cst_7 = arith.constant -13.8155107 : f32
    %cst_8 = arith.constant -1.00000045E-6 : f32
    %18 = vector.broadcast %cst_7 : f32 to vector<16x128xf32>
    %19 = arith.maximumf %18, %12 : vector<16x128xf32>
    %20 = vector.broadcast %cst_8 : f32 to vector<16x128xf32>
    %21 = arith.minimumf %20, %19 : vector<16x128xf32>
    %22 = arith.subf %12, %3 : vector<16x128xf32>
    %cst_9 = arith.constant 1.000000e+00 : f32
    %23 = vector.broadcast %cst_9 : f32 to vector<16x128xf32>
    %24 = arith.cmpf oeq, %4, %23 : vector<16x128xf32>
    %25 = arith.extui %24 : vector<16x128xi1> to vector<16x128xi32>
    %26 = arith.sitofp %25 : vector<16x128xi32> to vector<16x128xf32>
    %cst_10 = arith.constant 0.000000e+00 : f32
    %27 = vector.broadcast %cst_10 : f32 to vector<16x128xf32>
    %28 = arith.cmpf oeq, %4, %27 : vector<16x128xf32>
    %29 = arith.extui %28 : vector<16x128xi1> to vector<16x128xi32>
    %30 = arith.sitofp %29 : vector<16x128xi32> to vector<16x128xf32>
    %cst_11 = arith.constant 1.000000e+00 : f32
    %31 = vector.broadcast %cst_11 : f32 to vector<16x128xf32>
    %32 = arith.subf %31, %17 : vector<16x128xf32>
    %33 = arith.mulf %32, %32 : vector<16x128xf32>
    %34 = arith.mulf %26, %33 : vector<16x128xf32>
    %35 = arith.mulf %17, %17 : vector<16x128xf32>
    %36 = arith.mulf %30, %35 : vector<16x128xf32>
    %cst_12 = arith.constant 0.000000e+00 : f32
    %37 = vector.broadcast %cst_12 : f32 to vector<16x128xf32>
    %38 = arith.subf %37, %34 : vector<16x128xf32>
    %39 = arith.mulf %38, %21 : vector<16x128xf32>
    %cst_13 = arith.constant 3.000000e+00 : f32
    %40 = vector.broadcast %cst_13 : f32 to vector<16x128xf32>
    %41 = arith.mulf %40, %36 : vector<16x128xf32>
    %42 = arith.mulf %41, %22 : vector<16x128xf32>
    %43 = arith.subf %39, %42 : vector<16x128xf32>
    %c0_14 = arith.constant 0 : index
    %c0_15 = arith.constant 0 : index
    %c0_16 = arith.constant 0 : index
    %44 = vector.load %arg4[%c0_14, %c0_15, %c0_16] : memref<1x8x128xf32, #tpu.memory_space<vmem>>, vector<1x8x128xf32>
    %45 = vector.shape_cast %43 : vector<16x128xf32> to vector<2x8x128xf32>
    %cst_17 = arith.constant dense<0.000000e+00> : vector<8x128xf32>
    %46 = vector.multi_reduction <add>, %45, %cst_17 [0] : vector<2x8x128xf32> to vector<8x128xf32>
    %47 = vector.shape_cast %46 : vector<8x128xf32> to vector<1x8x128xf32>
    %48 = arith.addf %44, %47 : vector<1x8x128xf32>
    %c0_18 = arith.constant 0 : index
    %c0_19 = arith.constant 0 : index
    %c0_20 = arith.constant 0 : index
    %49 = vector.load %arg4[%c0_18, %c0_19, %c0_20] : memref<1x8x128xf32, #tpu.memory_space<vmem>>, vector<1x8x128xf32>
    tpu.vector_store %arg4[%c0_18, %c0_19, %c0_20], %48 {strides = array<i32>} : memref<1x8x128xf32, #tpu.memory_space<vmem>>, vector<1x8x128xf32>,
    return
  }
  func.func @transform_0(%arg0: i32, %arg1: i32) -> (i32, i32) {
    %c1_i32 = arith.constant 1 : i32
    %0 = arith.muli %arg0, %c1_i32 : i32
    %1 = arith.addi %0, %arg1 : i32
    %c0_i32 = arith.constant 0 : i32
    %c0_i32_0 = arith.constant 0 : i32
    return %1, %c0_i32 : i32, i32
  }
  func.func @transform_1(%arg0: i32, %arg1: i32) -> (i32, i32) {
    %c1_i32 = arith.constant 1 : i32
    %0 = arith.muli %arg0, %c1_i32 : i32
    %1 = arith.addi %0, %arg1 : i32
    %c0_i32 = arith.constant 0 : i32
    %c0_i32_0 = arith.constant 0 : i32
    return %1, %c0_i32 : i32, i32
  }
  func.func @transform_2(%arg0: i32, %arg1: i32) -> (i32, i32, i32) {
    %c0_i32 = arith.constant 0 : i32
    %c0_i32_0 = arith.constant 0 : i32
    %c0_i32_1 = arith.constant 0 : i32
    return %arg0, %c0_i32, %c0_i32_0 : i32, i32, i32
  }
}

</mosaic_0001>

<llo_original>
// kernel: tpu_custom_call.1
$region0: #{tpu_custom_call.1}
  #allocation0 [shape = 'u32[]', space=smem, size = 0x4, offset = 0x4, fixed_abs, tag = 'smem constant byte address 0x4 - core index']
  #allocation1 [shape = 'u32[144,128]{1,0:T(1,128)}', space=vmem, size = 0x12000, scoped, tag = 'internal scratch']
  %s0 = inlined_call_operand.hbm [shape: f32[16,128], index: 0, kind: input, shape index: {}]
  %s1 = inlined_call_operand.hbm [shape: f32[16,128], index: 1, kind: input, shape index: {}]
  %s2 = inlined_call_operand.hbm [shape: f32[1,8,128], index: 2, kind: output, shape index: {}]
  %s3 = sld [smem:[#allocation0]]
  $region30: #{tpu_custom_call.1} parent=0
    _
  %s5 = ssub.s32 1, %s3
  %s6 = scalar_select 0, %s5, %s3
  $region1: #{tpu_custom_call.1} parent=0
    #allocation2 [shape = 'u8[8192]{0}', space=vmem, size = 0x2000, scoped, tag = 'input window, operand 0, single buffered']
    #allocation3 [shape = 's32[1]{0}', space=sflag, size = 0x4, scoped, tag = 'scoped memory for tpu_custom_call.1']
    #allocation4 [shape = 's32[1]{0}', space=sflag, size = 0x4, scoped, tag = 'scoped memory for tpu_custom_call.1']
    #allocation5 [shape = 'u8[8192]{0}', space=vmem, size = 0x2000, scoped, tag = 'input window, operand 1, single buffered']
    #allocation6 [shape = 's32[1]{0}', space=sflag, size = 0x4, scoped, tag = 'scoped memory for tpu_custom_call.1']
    #allocation7 [shape = 'u8[4096]{0}', space=vmem, size = 0x1000, scoped, tag = 'output window, operand 0, single buffered']
    %7 = vsyncpa [#allocation3], 0
    %8 = vsyncpa [#allocation6], 0
    %9 = vsyncpa [#allocation4], 0
    // Predicated region
    $region2: #{tpu_custom_call.1} parent=1 // pred_check
      _
    $region3: #{tpu_custom_call.1} parent=1 // pred_check_branch
      %11 = sbr.rel (0) target = $region5
    $region4: #{tpu_custom_call.1} parent=1 // pred_region
      %s12 = sadd.s32 0, 0
      %s13 = smul.u32 2, %s12
      %s15 = ssub.s32 256, 256
      %16 = vsyncadd [#allocation3], %s15
      %s17 = smul.addr %s13, 128
      %s18 = scalar_lea.hbm %s0, %s17
      %s19 = sshll.u32 [#allocation2], 4
      %s20 = int_to_ptr.vmem [resolvable:$true] %s19
      %25 = dma.hbm_to_vmem [thread:$0]  %s18, 256, %s20, [#allocation3], 128, 128, 8
    $region5: #{tpu_custom_call.1} parent=1 // pred_fallthru
      _
    // Predicated region
    $region6: #{tpu_custom_call.1} parent=1 // pred_check
      _
    $region7: #{tpu_custom_call.1} parent=1 // pred_check_branch
      %27 = sbr.rel (0) target = $region9
    $region8: #{tpu_custom_call.1} parent=1 // pred_region
      %s28 = sadd.s32 0, 0
      %s29 = smul.u32 2, %s28
      %s31 = ssub.s32 256, 256
      %32 = vsyncadd [#allocation6], %s31
      %s33 = smul.addr %s29, 128
      %s34 = scalar_lea.hbm %s1, %s33
      %s35 = sshll.u32 [#allocation5], 4
      %s36 = int_to_ptr.vmem [resolvable:$true] %s35
      %41 = dma.hbm_to_vmem [thread:$0]  %s34, 256, %s36, [#allocation6], 128, 128, 8
    $region9: #{tpu_custom_call.1} parent=1 // pred_fallthru
      _
    // Predicated region
    $region10: #{tpu_custom_call.1} parent=1 // pred_check
      _
    $region11: #{tpu_custom_call.1} parent=1 // pred_check_branch
      %43 = sbr.rel (0) target = $region13
    $region12: #{tpu_custom_call.1} parent=1 // pred_region
      %44 = dma.done [#allocation3], 256
    $region13: #{tpu_custom_call.1} parent=1 // pred_fallthru
      _
    // Predicated region
    $region14: #{tpu_custom_call.1} parent=1 // pred_check
      _
    $region15: #{tpu_custom_call.1} parent=1 // pred_check_branch
      %46 = sbr.rel (0) target = $region17
    $region16: #{tpu_custom_call.1} parent=1 // pred_region
      %47 = dma.done [#allocation6], 256
    $region17: #{tpu_custom_call.1} parent=1 // pred_fallthru
      _
    %s48 = sadd.s32 0, 0
    %s49 = smul.u32 2, %s48
    %s50 = sadd.s32 0, 0
    %s51 = smul.u32 2, %s50
    %p52 = scmp.eq.s32.totalorder 0, 0
    // Predicated region
    $region18: #{tpu_custom_call.1} parent=1 // pred_check
      %p53 = pneg %p52
    $region19: #{tpu_custom_call.1} parent=1 // pred_check_branch
      %55 = sbr.rel (%p53) target = $region21
    $region20: #{tpu_custom_call.1} parent=1 // pred_region
      %56 = vst [vmem:[#allocation7] sm:$0xff] 0.0
    $region21: #{tpu_custom_call.1} parent=1 // pred_fallthru
      _
    %v57 = vld [vmem:[#allocation2] sm:$0xff]
    %v58 = vld [vmem:[#allocation2 + $0x8] sm:$0xff]
    %v59 = vld [vmem:[#allocation5] sm:$0xff]
    %v60 = vld [vmem:[#allocation5 + $0x8] sm:$0xff]
    %v61 = vmin.f32 %v57, 0.0
    %v62 = vmin.f32 %v58, 0.0
    %v63 = vand.u32 2147483647, %v57
    %v64 = vand.u32 2147483647, %v58
    %v65 = vsub.f32 0.0, %v63
    %v66 = vsub.f32 0.0, %v64
    %v67 = vmul.f32 %v65, 1.442695
    %v68 = vpow.pop %v67
    %v69 = vmul.f32 %v66, 1.442695
    %v70 = vpow.pop %v69
    %v71 = vadd.f32 %v68, 1.0
    %v72 = vlog2.pop %v71
    %v73 = vmul.f32 %v72, 0.6931472
    %v74 = vmul.f32 -0.5, %v68
    %v75 = vadd.f32 %v74, 1.0
    %v76 = vmul.f32 %v75, %v68
    %v77 = vand.u32 2147483647, %v68
    %vm78 = vcmp.lt.f32.partialorder %v77, 0.0004427343
    %v79 = vsel %vm78, %v76, %v73
    %v80 = vadd.f32 %v70, 1.0
    %v81 = vlog2.pop %v80
    %v82 = vmul.f32 %v81, 0.6931472
    %v83 = vmul.f32 -0.5, %v70
    %v84 = vadd.f32 %v83, 1.0
    %v85 = vmul.f32 %v84, %v70
    %v86 = vand.u32 2147483647, %v70
    %vm87 = vcmp.lt.f32.partialorder %v86, 0.0004427343
    %v88 = vsel %vm87, %v85, %v82
    %v89 = vsub.f32 %v61, %v79
    %v90 = vsub.f32 %v62, %v88
    %v91 = vmul.f32 %v89, 1.442695
    %v92 = vpow.pop %v91
    %v93 = vmul.f32 %v90, 1.442695
    %v94 = vpow.pop %v93
    %v95 = vmax.f32 %v92, 1e-06
    %v96 = vmax.f32 %v94, 1e-06
    %v97 = vmin.f32 %v95, 0.999999
    %v98 = vmin.f32 %v96, 0.999999
    %v99 = vmax.f32 %v89, -13.815511
    %v100 = vmax.f32 %v90, -13.815511
    %v101 = vmin.f32 %v99, -1.0000005e-06
    %v102 = vmin.f32 %v100, -1.0000005e-06
    %v103 = vsub.f32 %v89, %v57
    %v104 = vsub.f32 %v90, %v58
    %vm105 = vcmp.eq.f32.partialorder %v59, 1.0
    %vm106 = vcmp.eq.f32.partialorder %v60, 1.0
    %v107 = vsel %vm105, 1, 0
    %v108 = vsel %vm106, 1, 0
    %v109 = vcvt.s32.f32 %v107
    %v110 = vcvt.s32.f32 %v108
    %vm111 = vcmp.eq.f32.partialorder %v59, 0.0
    %vm112 = vcmp.eq.f32.partialorder %v60, 0.0
    %v113 = vsel %vm111, 1, 0
    %v114 = vsel %vm112, 1, 0
    %v115 = vcvt.s32.f32 %v113
    %v116 = vcvt.s32.f32 %v114
    %v117 = vsub.f32 1.0, %v97
    %v118 = vsub.f32 1.0, %v98
    %v119 = vmul.f32 %v117, %v117
    %v120 = vmul.f32 %v118, %v118
    %v121 = vmul.f32 %v109, %v119
    %v122 = vmul.f32 %v110, %v120
    %v123 = vmul.f32 %v97, %v97
    %v124 = vmul.f32 %v98, %v98
    %v125 = vmul.f32 %v115, %v123
    %v126 = vmul.f32 %v116, %v124
    %v127 = vsub.f32 0.0, %v121
    %v128 = vsub.f32 0.0, %v122
    %v129 = vmul.f32 %v127, %v101
    %v130 = vmul.f32 %v128, %v102
    %v131 = vmul.f32 %v125, 3.0
    %v132 = vmul.f32 %v126, 3.0
    %v133 = vmul.f32 %v131, %v103
    %v134 = vmul.f32 %v132, %v104
    %v135 = vsub.f32 %v129, %v133
    %v136 = vsub.f32 %v130, %v134
    %v137 = vld [vmem:[#allocation7] sm:$0xff]
    %v138 = vadd.f32 %v135, %v136
    %v139 = vadd.f32 %v137, %v138
    %140 = vst [vmem:[#allocation7] sm:$0xff] %v139
    // Predicated region
    $region22: #{tpu_custom_call.1} parent=1 // pred_check
      _
    $region23: #{tpu_custom_call.1} parent=1 // pred_check_branch
      %142 = sbr.rel (0) target = $region25
    $region24: #{tpu_custom_call.1} parent=1 // pred_region
      %s144 = ssub.s32 128, 128
      %145 = vsyncadd [#allocation4], %s144
      %s147 = sshll.u32 [#allocation7], 4
      %s148 = int_to_ptr.vmem [resolvable:$true] %s147
      %150 = dma.vmem_to_hbm [thread:$0]  %s148, 128, %s2, [#allocation4]
    $region25: #{tpu_custom_call.1} parent=1 // pred_fallthru
      _
    // Predicated region
    $region26: #{tpu_custom_call.1} parent=1 // pred_check
      _
    $region27: #{tpu_custom_call.1} parent=1 // pred_check_branch
      %152 = sbr.rel (0) target = $region29
    $region28: #{tpu_custom_call.1} parent=1 // pred_region
      %153 = dma.done [#allocation4], 128
    $region29: #{tpu_custom_call.1} parent=1 // pred_fallthru
      _
    %154 = vsyncpa [#allocation3], 1
    %155 = vsyncpa [#allocation6], 1
    %156 = vsyncpa [#allocation4], 1

</llo_original>
